<compile_context>
chip_gen: v7x
topology: tpu7x:2x2x1
jax: 0.10.0
libtpu: 0.0.40
codegen_flags: <defaults>
</compile_context>

<pallas_src>
import functools

import jax
import jax.numpy as jnp
from jax.experimental import pallas as pl
from jax.experimental.pallas import tpu as pltpu


_LANE = 128                           # vreg lane count
_MAX_LANES = 8192                     # max lanes per row (wide contiguous DMAs)
_TARGET_TILE_BYTES = 8 * 1024 * 1024  # 8 MiB tile * (in+out, double buffered) = 32 MiB resident
_VMEM_LIMIT_BYTES = 48 << 20          # <= v7x physical 64 MiB, > 32 MiB resident


def _copy_kernel(x_ref, o_ref):
    # Pure data movement: HBM -> VMEM -> HBM, values untouched.
    o_ref[...] = x_ref[...]


def _resolve_view_size(numel, size):
    """Resolve a torch.view-style size tuple (with at most one -1)."""
    size = tuple(int(s) for s in size)
    neg = [i for i, s in enumerate(size) if s == -1]
    assert len(neg) <= 1, "at most one -1 allowed in view size"
    if neg:
        known = 1
        for i, s in enumerate(size):
            if i != neg[0]:
                known *= s
        assert numel % known == 0, "view size incompatible with number of elements"
        size = size[: neg[0]] + (numel // known,) + size[neg[0] + 1:]
    prod = 1
    for s in size:
        prod *= s
    assert prod == numel, "view size incompatible with number of elements"
    return size


def _choose_slab(n_elems, sublane):
    """Pick a lane-dense (rows, lanes) 2-D shape for an n_elems buffer.

    Prefers the widest power-of-two lane width (<= _MAX_LANES) that keeps
    rows a multiple of the dtype's packed sublane count. Returns None if the
    buffer can't be laid out on the native vreg tiling without masking.
    """
    if n_elems % _LANE != 0:
        return None
    best = None
    lanes = _LANE
    while lanes <= _MAX_LANES and n_elems % lanes == 0:
        rows = n_elems // lanes
        if rows % sublane == 0:
            best = (rows, lanes)
        lanes *= 2
    if best is not None:
        return best
    rows = n_elems // _LANE
    if rows <= sublane:
        # Tiny array: a single full-array block is legal even if rows % sublane != 0.
        return (rows, _LANE)
    return None


def _pick_tile_rows(rows, lanes, itemsize, sublane):
    """Largest row-tile <= ~_TARGET_TILE_BYTES that divides rows exactly."""
    if rows % sublane != 0:
        return rows  # tiny single-block case
    bytes_per_row = lanes * itemsize
    target = max(sublane, (_TARGET_TILE_BYTES // bytes_per_row) // sublane * sublane)
    target = min(target, rows)
    t = target
    while t >= sublane:
        if rows % t == 0:
            return t
        t -= sublane
    return rows


@functools.partial(jax.jit, static_argnums=(1, 2))
def _forced_copy(tensor, out_shape, slab):
    """Single-jit forced copy: reshape -> tiled Pallas copy -> reshape."""
    rows, lanes = slab
    itemsize = jnp.dtype(tensor.dtype).itemsize
    sublane = 32 // itemsize  # 8 for 32-bit, 16 for 16-bit, 32 for 8-bit
    tile_r = _pick_tile_rows(rows, lanes, itemsize, sublane)
    nbytes = rows * lanes * itemsize

    slab2d = jnp.reshape(tensor, (rows, lanes))
    copied = pl.pallas_call(
        _copy_kernel,
        out_shape=jax.ShapeDtypeStruct((rows, lanes), tensor.dtype),
        grid_spec=pltpu.PrefetchScalarGridSpec(
            num_scalar_prefetch=0,
            grid=(rows // tile_r,),
            in_specs=[pl.BlockSpec((tile_r, lanes), lambda i: (i, 0))],
            out_specs=pl.BlockSpec((tile_r, lanes), lambda i: (i, 0)),
        ),
        compiler_params=pltpu.CompilerParams(
            # Row axis is independent; TODO(synk): evaluate pltpu.CORE_PARALLEL
            # on v7x to shard the copy across both TensorCores.
            dimension_semantics=("parallel",),
            vmem_limit_bytes=_VMEM_LIMIT_BYTES,
        ),
        cost_estimate=pl.CostEstimate(
            flops=0, transcendentals=0, bytes_accessed=2 * nbytes),
    )(slab2d)
    return jnp.reshape(copied, out_shape)


def _pallas_copy_view(tensor, out_shape):
    itemsize = jnp.dtype(tensor.dtype).itemsize
    if itemsize > 4:
        # TODO(synk): 64-bit dtypes fall back to the metadata reshape instead
        # of a Pallas copy (the flag's "bytes must move" contract is relaxed).
        return jnp.reshape(tensor, out_shape)
    sublane = 32 // itemsize
    slab = _choose_slab(tensor.size, sublane)
    if slab is None:
        # TODO(synk): ragged sizes that don't fit the native vreg tiling fall
        # back to the metadata reshape; a masked copy would be strictly slower.
        return jnp.reshape(tensor, out_shape)
    return _forced_copy(tensor, tuple(out_shape), slab)


def pallas_view(tensor, size, *, force_pallas_copy=False):
    """Equivalent of View(size).forward(tensor).

    Default path: torch .view on a contiguous tensor is metadata-only, and
    jnp.reshape of a row-major array is the exact zero-cost equivalent.
    `force_pallas_copy=True` instead routes the bytes through the tiled,
    double-buffered Pallas identity-copy kernel.
    """
    out_shape = _resolve_view_size(tensor.size, size)
    if not force_pallas_copy:
        return jnp.reshape(tensor, out_shape)
    return _pallas_copy_view(tensor, out_shape)


if __name__ == "__main__":
    key = jax.random.PRNGKey(0)
    # NCHW conv-feature-like input, as View is used in beta_vae to flatten
    # encoder features: View((-1, C*H*W)).
    x = jax.random.normal(key, (2, 4, 16, 16), dtype=jnp.float32)
    size = (-1, 4 * 16 * 16)

    # Default path: free metadata reshape (matches torch .view semantics).
    y_fast = jax.block_until_ready(pallas_view(x, size))

    # Pallas tiled-copy path (exercises the kernel), f32 and bf16 (dtype-native).
    y_pallas = jax.block_until_ready(pallas_view(x, size, force_pallas_copy=True))
    x_bf16 = x.astype(jnp.bfloat16)
    y_bf16 = jax.block_until_ready(pallas_view(x_bf16, size, force_pallas_copy=True))

    # Verify against the plain JAX reference (== torch .view semantics).
    y_ref = jnp.reshape(x, (2, 4 * 16 * 16))
    y_ref_bf16 = jnp.reshape(x_bf16, (2, 4 * 16 * 16))
    assert y_fast.shape == (2, 1024), y_fast.shape
    assert y_pallas.shape == (2, 1024), y_pallas.shape
    assert y_pallas.dtype == x.dtype
    assert y_bf16.shape == (2, 1024) and y_bf16.dtype == jnp.bfloat16
    assert bool(jnp.all(y_fast == y_ref))
    assert bool(jnp.all(y_pallas == y_ref))
    assert bool(jnp.all(y_bf16 == y_ref_bf16))

    print("KERNEL_OK")
</pallas_src>

<mosaic_0001>
module attributes {stable_mosaic.version = 11 : i64} {
  func.func @_copy_kernel(%arg0: i32, %arg1: memref<8x256xf32, #tpu.memory_space<vmem>>, %arg2: memref<8x256xf32, #tpu.memory_space<vmem>>) attributes {dimension_semantics = [#tpu.dimension_semantics<parallel>], iteration_bounds = array<i64: 1>, scalar_prefetch = 0 : i64, scratch_operands = 0 : i64, tpu.core_type = #tpu.core_type<tc>, window_params = [{transform_indices = @transform_0, window_bounds = array<i64: 8, 256>}, {transform_indices = @transform_1, window_bounds = array<i64: 8, 256>}]} {
    %c0 = arith.constant 0 : index
    %c0_0 = arith.constant 0 : index
    %0 = vector.load %arg1[%c0, %c0_0] : memref<8x256xf32, #tpu.memory_space<vmem>>, vector<8x256xf32>
    %c0_1 = arith.constant 0 : index
    %c0_2 = arith.constant 0 : index
    %1 = vector.load %arg2[%c0_1, %c0_2] : memref<8x256xf32, #tpu.memory_space<vmem>>, vector<8x256xf32>
    tpu.vector_store %arg2[%c0_1, %c0_2], %0 {strides = array<i32>} : memref<8x256xf32, #tpu.memory_space<vmem>>, vector<8x256xf32>,
    return
  }
  func.func @transform_0(%arg0: i32) -> (i32, i32) {
    %c0_i32 = arith.constant 0 : i32
    %c0_i32_0 = arith.constant 0 : i32
    return %arg0, %c0_i32 : i32, i32
  }
  func.func @transform_1(%arg0: i32) -> (i32, i32) {
    %c0_i32 = arith.constant 0 : i32
    %c0_i32_0 = arith.constant 0 : i32
    return %arg0, %c0_i32 : i32, i32
  }
}

</mosaic_0001>

<llo_original>
// kernel: _forced_copy.1
$region0: #{_forced_copy.1}
  #allocation0 [shape = 'u32[]', space=smem, size = 0x4, offset = 0x4, fixed_abs, tag = 'smem constant byte address 0x4 - core index']
  #allocation1 [shape = 'u32[144,128]{1,0:T(1,128)}', space=vmem, size = 0x12000, scoped, tag = 'internal scratch']
  %s0 = inlined_call_operand.vmem [shape: f32[8,256], index: 0, kind: input, shape index: {}]
  %s1 = inlined_call_operand.vmem [shape: f32[8,256], index: 1, kind: output, shape index: {}]
  %s2 = sld [smem:[#allocation0]]
  $region14: #{_forced_copy.1} parent=0
    _
  %s4 = ssub.s32 1, %s2
  %s5 = scalar_select 0, %s4, %s2
  // Predicated region
  $region2: #{_forced_copy.1} parent=0 // pred_check
    _
  $region3: #{_forced_copy.1} parent=0 // pred_check_branch
    %7 = sbr.rel (0) target = $region5
  $region4: #{_forced_copy.1} parent=0 // pred_region
    _
  $region5: #{_forced_copy.1} parent=0 // pred_fallthru
    _
  %v8 = vld [vmem:[%s0] sm:$0xff]
  %v9 = vld [vmem:[%s0 + $0x8] sm:$0xff]
  %10 = vst [vmem:[%s1] sm:$0xff] %v8
  %11 = vst [vmem:[%s1 + $0x8] sm:$0xff] %v9
  // Predicated region
  $region6: #{_forced_copy.1} parent=0 // pred_check
    _
  $region7: #{_forced_copy.1} parent=0 // pred_check_branch
    %13 = sbr.rel (0) target = $region9
  $region8: #{_forced_copy.1} parent=0 // pred_region
    _
  $region9: #{_forced_copy.1} parent=0 // pred_fallthru
    _
  // Predicated region
  $region10: #{_forced_copy.1} parent=0 // pred_check
    _
  $region11: #{_forced_copy.1} parent=0 // pred_check_branch
    %15 = sbr.rel (0) target = $region13
  $region12: #{_forced_copy.1} parent=0 // pred_region
    _
  $region13: #{_forced_copy.1} parent=0 // pred_fallthru
    _

</llo_original>
